<compile_context>
chip_gen: v7x
topology: tpu7x:2x2x1
jax: 0.10.0
libtpu: 0.0.40
codegen_flags: <defaults>
</compile_context>

<pallas_src>
import functools

import jax
import jax.numpy as jnp
from jax import lax
from jax.experimental import pallas as pl
from jax.experimental.pallas import tpu as pltpu

# Widest lane-dense last dim that divides the element count -> no pad copy.
_LANE_CANDIDATES = (2048, 1024, 512, 256, 128)
_FALLBACK_LANE = 1024
_MAX_BLOCK_BYTES = 8 * 1024 * 1024       # diminishing returns past ~8 MiB
_MAX_VMEM_LIMIT = 96 * 1024 * 1024       # leave headroom even on 128 MiB chips


# --------------------------- chip introspection -----------------------------

def _vmem_capacity_bytes():
    """Best-effort physical VMEM capacity; conservative (v7x) fallback."""
    try:
        cap = getattr(pltpu.get_tpu_info(), "vmem_capacity_bytes", None)
        if cap:
            return int(cap)
    except Exception:
        pass
    return 64 * 1024 * 1024


def _num_tensorcores():
    """Best-effort TensorCores-per-device; 1 (safe) if undetectable."""
    try:
        info = pltpu.get_tpu_info()
        for name in ("num_cores", "core_count", "num_tensorcores",
                     "tensorcores_per_chip", "num_tensor_cores"):
            v = getattr(info, name, None)
            if v:
                return max(1, int(v))
    except Exception:
        pass
    try:
        kind = jax.devices()[0].device_kind.lower()
        if ("v7" in kind) or ("v5p" in kind) or ("v4" in kind):
            return 2
    except Exception:
        pass
    return 1


# ------------------------------- math core ----------------------------------

def _smooth_l1_elementwise(x, t, *, beta, inv_2beta, half_beta):
    """Element-wise Fast R-CNN smooth L1 in f32. beta constants are static."""
    d = jnp.abs(x - t)
    if beta < 1e-5:
        # Spec: for beta < 1e-5, pure L1 loss is computed.
        return d
    return jnp.where(d < beta, d * d * inv_2beta, d - half_beta)


# ------------------------------- kernels -------------------------------------

def _elem_kernel(x_ref, t_ref, o_ref, *, beta, inv_2beta, half_beta):
    x = x_ref[...].astype(jnp.float32)
    t = t_ref[...].astype(jnp.float32)
    loss = _smooth_l1_elementwise(x, t, beta=beta, inv_2beta=inv_2beta,
                                  half_beta=half_beta)
    o_ref[...] = loss.astype(o_ref.dtype)


def _reduce_kernel(x_ref, t_ref, o_ref, *, beta, inv_2beta, half_beta,
                   rows, tile_r, tiles_per_split, nt, acc_fold, need_mask):
    # Grid = (split, tiles_per_split); axis 0 "parallel" (one resident output
    # block per split), axis 1 "arbitrary" (accumulate into o_ref).
    k = pl.program_id(1)

    @pl.when(k == 0)
    def _():
        o_ref[...] = jnp.zeros_like(o_ref)

    x = x_ref[...].astype(jnp.float32)
    t = t_ref[...].astype(jnp.float32)
    loss = _smooth_l1_elementwise(x, t, beta=beta, inv_2beta=inv_2beta,
                                  half_beta=half_beta)

    acc_r = o_ref.shape[0]
    lane_w = o_ref.shape[1]

    def _fold(v):
        # Fold rows inside the tile into the small resident accumulator.
        # Pure VPU vreg adds (sublane-aligned groups), no cross-lane work.
        if acc_fold > 1:
            return v.reshape(acc_fold, acc_r, lane_w).sum(axis=0)
        return v

    if not need_mask:
        o_ref[...] += _fold(loss)
    else:
        tile = pl.program_id(0) * tiles_per_split + k
        is_boundary = tile >= (nt - 1)   # partial last tile or clamped duplicate

        @pl.when(jnp.logical_not(is_boundary))
        def _():
            o_ref[...] += _fold(loss)          # interior tiles: unmasked

        @pl.when(is_boundary)
        def _():
            # Mask rows past the real extent. The garbage from the OOB /
            # clamped DMA never reaches the sum because jnp.where is a select.
            rid = tile * tile_r + lax.broadcasted_iota(jnp.int32, loss.shape, 0)
            o_ref[...] += _fold(jnp.where(rid < rows, loss, 0.0))


# ------------------------------- wrapper -------------------------------------

def _plan_slab(n):
    """Pick (lane_w, padded_len); prefer a divisor of n so no pad copy is needed."""
    for w in _LANE_CANDIDATES:
        if n % w == 0:
            return w, n
    w = _FALLBACK_LANE
    padded = ((n + w - 1) // w) * w
    return w, padded


def _to_slab(a, lane_w, padded_len):
    flat = a.reshape(-1)
    if padded_len != flat.shape[0]:
        # Rare slow path (n not a multiple of 128). Zero padding is benign:
        # smooth_l1(0,0)==0 and the 'mean' denominator uses the true count.
        flat = jnp.pad(flat, (0, padded_len - flat.shape[0]))
    return flat.reshape(padded_len // lane_w, lane_w)


def smooth_l1_loss_pallas(inp, target, beta=1.0, reduction="mean"):
    assert inp.shape == target.shape, "input and target must have the same shape"
    if reduction not in ("none", "mean", "sum"):
        raise ValueError(f"unknown reduction: {reduction}")
    if beta < 0:
        raise ValueError("beta must be non-negative")

    orig_shape = inp.shape
    orig_dtype = inp.dtype
    n_elem = int(inp.size)

    if n_elem == 0:
        if reduction == "none":
            return jnp.zeros(orig_shape, orig_dtype)
        return jnp.zeros((), orig_dtype)

    beta = float(beta)
    inv_2beta = (0.5 / beta) if beta >= 1e-5 else 0.0
    half_beta = 0.5 * beta

    lane_w, padded_len = _plan_slab(n_elem)
    rows = padded_len // lane_w

    itemsize = jnp.dtype(orig_dtype).itemsize
    # Sublane-packing granularity: 8 (f32) / 16 (bf16, fp16) / 32 (int8, fp8).
    pack = max(8, 32 // max(1, itemsize))

    # Per-generation VMEM budget and block size.
    vmem_cap = _vmem_capacity_bytes()
    vmem_limit = int(min(vmem_cap * 3 // 4, _MAX_VMEM_LIMIT))
    # Keep ~6 double-buffered blocks (2 in + 1 out, x2) under the limit.
    target_block_bytes = min(_MAX_BLOCK_BYTES, vmem_limit // 8)
    tile_r_max = (target_block_bytes // (lane_w * itemsize)) // pack * pack
    tile_r_max = max(pack, tile_r_max)

    tile_r = rows if rows <= tile_r_max else tile_r_max
    nt = (rows + tile_r - 1) // tile_r                   # number of row tiles

    x2d = _to_slab(inp, lane_w, padded_len)
    t2d = _to_slab(target, lane_w, padded_len)

    kernel_consts = dict(beta=beta, inv_2beta=inv_2beta, half_beta=half_beta)

    if reduction == "none":
        blk = (tile_r, lane_w)
        spec = pl.BlockSpec(blk, lambda i: (i, 0))
        out2d = pl.pallas_call(
            functools.partial(_elem_kernel, **kernel_consts),
            out_shape=jax.ShapeDtypeStruct((rows, lane_w), orig_dtype),
            grid_spec=pltpu.PrefetchScalarGridSpec(
                num_scalar_prefetch=0,
                grid=(nt,),
                in_specs=[spec, spec],
                out_specs=pl.BlockSpec(blk, lambda i: (i, 0)),
            ),
            compiler_params=pltpu.CompilerParams(
                dimension_semantics=("parallel",),
                vmem_limit_bytes=vmem_limit),
            cost_estimate=pl.CostEstimate(
                flops=5 * n_elem,
                transcendentals=0,
                bytes_accessed=3 * itemsize * n_elem),
        )(x2d, t2d)
        if padded_len == n_elem:
            return out2d.reshape(orig_shape)
        return out2d.reshape(-1)[:n_elem].reshape(orig_shape)

    # ---- 'mean' / 'sum' ----
    num_tc = _num_tensorcores()
    split = 2 if (num_tc >= 2 and nt >= 2) else 1     # only split on dual-TC chips
    tiles_per_split = (nt + split - 1) // split
    need_mask = (rows % tile_r != 0) or (nt % split != 0)

    if nt % split == 0:
        def in_map(j, k, _tps=tiles_per_split):
            return (j * _tps + k, 0)
    else:
        # Clamp the (at most one) duplicate trailing tile to a valid block; it
        # is fully masked to zero inside the kernel.
        def in_map(j, k, _tps=tiles_per_split, _nt=nt):
            return (jnp.minimum(j * _tps + k, _nt - 1), 0)

    # Small resident accumulator: fold tile rows into acc_r rows when possible.
    if tile_r % 8 == 0:
        acc_r = 8
    else:
        acc_r = tile_r            # tiny full-array tile (rows < 8): no fold
    acc_fold = tile_r // acc_r

    in_spec = pl.BlockSpec((tile_r, lane_w), in_map)
    out_spec = pl.BlockSpec((acc_r, lane_w), lambda j, k: (j, 0))

    partials = pl.pallas_call(
        functools.partial(_reduce_kernel, **kernel_consts,
                          rows=rows, tile_r=tile_r,
                          tiles_per_split=tiles_per_split, nt=nt,
                          acc_fold=acc_fold, need_mask=need_mask),
        out_shape=jax.ShapeDtypeStruct((split * acc_r, lane_w), jnp.float32),
        grid_spec=pltpu.PrefetchScalarGridSpec(
            num_scalar_prefetch=0,
            grid=(split, tiles_per_split),
            in_specs=[in_spec, in_spec],
            out_specs=out_spec,
        ),
        compiler_params=pltpu.CompilerParams(
            dimension_semantics=("parallel", "arbitrary"),
            vmem_limit_bytes=vmem_limit),
        cost_estimate=pl.CostEstimate(
            flops=6 * n_elem,
            transcendentals=0,
            bytes_accessed=2 * itemsize * n_elem),
    )(x2d, t2d)

    total = jnp.sum(partials, dtype=jnp.float32)   # tiny (<=128 KiB) final reduce
    if reduction == "mean":
        total = total / jnp.float32(n_elem)
    return total.astype(orig_dtype)


class SmoothL1Loss:
    """JAX/Pallas port of the PyTorch SmoothL1Loss module (forward only)."""

    def __init__(self, size_average=None, reduce=None, reduction: str = "mean",
                 beta: float = 1.0):
        # Deprecated torch args mapped the same way _Reduction.legacy_get_string does.
        if size_average is not None or reduce is not None:
            if reduce is False:
                reduction = "none"
            elif size_average is False:
                reduction = "sum"
            else:
                reduction = "mean"
        self.reduction = reduction
        self.beta = beta

    def __call__(self, inp, target):
        return smooth_l1_loss_pallas(inp, target, beta=self.beta,
                                     reduction=self.reduction)


if __name__ == "__main__":
    key = jax.random.PRNGKey(0)
    k1, k2 = jax.random.split(key)
    # NCHW example input, same as a typical detection regression head output.
    x = jax.random.normal(k1, (2, 4, 16, 16), dtype=jnp.float32)
    y = jax.random.normal(k2, (2, 4, 16, 16), dtype=jnp.float32)

    module = SmoothL1Loss(reduction="mean", beta=1.0)
    loss = module(x, y)
    jax.block_until_ready(loss)

    # Reference in plain JAX (beta = 1.0).
    d = jnp.abs(x - y)
    ref_elem = jnp.where(d < 1.0, 0.5 * d * d, d - 0.5)
    ref_mean = jnp.mean(ref_elem)
    assert jnp.allclose(loss, ref_mean, rtol=1e-5, atol=1e-6), (loss, ref_mean)

    # 'none' and 'sum' paths.
    loss_none = SmoothL1Loss(reduction="none")(x, y)
    loss_sum = SmoothL1Loss(reduction="sum")(x, y)

    # Odd-sized input: exercises the (rare) padded path.
    x_odd = jax.random.normal(k1, (3, 5, 7), dtype=jnp.float32)
    y_odd = jax.random.normal(k2, (3, 5, 7), dtype=jnp.float32)
    loss_odd = SmoothL1Loss(reduction="mean")(x_odd, y_odd)

    # Larger input: exercises row-folded accumulation (and the split / masking
    # paths on multi-TensorCore chips).
    x_big = jax.random.normal(k1, (600, 1024), dtype=jnp.float32)
    y_big = jax.random.normal(k2, (600, 1024), dtype=jnp.float32)
    loss_big = SmoothL1Loss(reduction="mean")(x_big, y_big)

    # bf16 input: exercises the dtype-aware block sizing / packing granularity.
    x_bf = x_big.astype(jnp.bfloat16)
    y_bf = y_big.astype(jnp.bfloat16)
    loss_bf = SmoothL1Loss(reduction="sum")(x_bf, y_bf)

    jax.block_until_ready((loss_none, loss_sum, loss_odd, loss_big, loss_bf))

    assert loss_none.shape == x.shape
    assert jnp.allclose(loss_none, ref_elem, rtol=1e-5, atol=1e-6)
    assert jnp.allclose(loss_sum, jnp.sum(ref_elem), rtol=1e-5, atol=1e-4)

    d_odd = jnp.abs(x_odd - y_odd)
    ref_odd = jnp.mean(jnp.where(d_odd < 1.0, 0.5 * d_odd * d_odd, d_odd - 0.5))
    assert jnp.allclose(loss_odd, ref_odd, rtol=1e-5, atol=1e-6), (loss_odd, ref_odd)

    d_big = jnp.abs(x_big - y_big)
    ref_big = jnp.mean(jnp.where(d_big < 1.0, 0.5 * d_big * d_big, d_big - 0.5))
    assert jnp.allclose(loss_big, ref_big, rtol=1e-5, atol=1e-6), (loss_big, ref_big)

    d_bf = jnp.abs(x_bf.astype(jnp.float32) - y_bf.astype(jnp.float32))
    ref_bf = jnp.sum(jnp.where(d_bf < 1.0, 0.5 * d_bf * d_bf, d_bf - 0.5))
    assert jnp.allclose(loss_bf.astype(jnp.float32), ref_bf, rtol=2e-2, atol=1.0)

    print("KERNEL_OK")
</pallas_src>

<mosaic_0001>
module attributes {stable_mosaic.version = 11 : i64} {
  func.func @_reduce_kernel(%arg0: i32, %arg1: i32, %arg2: memref<1x2048xf32, #tpu.memory_space<vmem>>, %arg3: memref<1x2048xf32, #tpu.memory_space<vmem>>, %arg4: memref<1x2048xf32, #tpu.memory_space<vmem>>) attributes {dimension_semantics = [#tpu.dimension_semantics<parallel>, #tpu.dimension_semantics<arbitrary>], iteration_bounds = array<i64: 1, 1>, scalar_prefetch = 0 : i64, scratch_operands = 0 : i64, tpu.core_type = #tpu.core_type<tc>, window_params = [{transform_indices = @transform_0, window_bounds = array<i64: 1, 2048>}, {transform_indices = @transform_1, window_bounds = array<i64: 1, 2048>}, {transform_indices = @transform_2, window_bounds = array<i64: 1, 2048>}]} {
    %c0_i32 = arith.constant 0 : i32
    %0 = arith.cmpi eq, %arg1, %c0_i32 : i32
    %1 = arith.extui %0 : i1 to i32
    %c0_i32_0 = arith.constant 0 : i32
    %2 = arith.cmpi ne, %1, %c0_i32_0 : i32
    scf.if %2 {
      %cst_10 = arith.constant 0.000000e+00 : f32
      %18 = vector.broadcast %cst_10 : f32 to vector<1x2048xf32>
      %c0_11 = arith.constant 0 : index
      %c0_12 = arith.constant 0 : index
      %19 = vector.load %arg4[%c0_11, %c0_12] : memref<1x2048xf32, #tpu.memory_space<vmem>>, vector<1x2048xf32>
      tpu.vector_store %arg4[%c0_11, %c0_12], %18 {strides = array<i32>} : memref<1x2048xf32, #tpu.memory_space<vmem>>, vector<1x2048xf32>,
    } else {
    }
    %c0 = arith.constant 0 : index
    %c0_1 = arith.constant 0 : index
    %3 = vector.load %arg2[%c0, %c0_1] : memref<1x2048xf32, #tpu.memory_space<vmem>>, vector<1x2048xf32>
    %c0_2 = arith.constant 0 : index
    %c0_3 = arith.constant 0 : index
    %4 = vector.load %arg3[%c0_2, %c0_3] : memref<1x2048xf32, #tpu.memory_space<vmem>>, vector<1x2048xf32>
    %5 = arith.subf %3, %4 : vector<1x2048xf32>
    %6 = math.absf %5 : vector<1x2048xf32>
    %cst = arith.constant 1.000000e+00 : f32
    %7 = vector.broadcast %cst : f32 to vector<1x2048xf32>
    %8 = arith.cmpf olt, %6, %7 : vector<1x2048xf32>
    %9 = arith.mulf %6, %6 : vector<1x2048xf32>
    %cst_4 = arith.constant 5.000000e-01 : f32
    %10 = vector.broadcast %cst_4 : f32 to vector<1x2048xf32>
    %11 = arith.mulf %9, %10 : vector<1x2048xf32>
    %cst_5 = arith.constant 5.000000e-01 : f32
    %12 = vector.broadcast %cst_5 : f32 to vector<1x2048xf32>
    %13 = arith.subf %6, %12 : vector<1x2048xf32>
    %14 = arith.select %8, %11, %13 : vector<1x2048xi1>, vector<1x2048xf32>
    %c0_6 = arith.constant 0 : index
    %c0_7 = arith.constant 0 : index
    %15 = vector.load %arg4[%c0_6, %c0_7] : memref<1x2048xf32, #tpu.memory_space<vmem>>, vector<1x2048xf32>
    %16 = arith.addf %15, %14 : vector<1x2048xf32>
    %c0_8 = arith.constant 0 : index
    %c0_9 = arith.constant 0 : index
    %17 = vector.load %arg4[%c0_8, %c0_9] : memref<1x2048xf32, #tpu.memory_space<vmem>>, vector<1x2048xf32>
    tpu.vector_store %arg4[%c0_8, %c0_9], %16 {strides = array<i32>} : memref<1x2048xf32, #tpu.memory_space<vmem>>, vector<1x2048xf32>,
    return
  }
  func.func @transform_0(%arg0: i32, %arg1: i32) -> (i32, i32) {
    %c1_i32 = arith.constant 1 : i32
    %0 = arith.muli %arg0, %c1_i32 : i32
    %1 = arith.addi %0, %arg1 : i32
    %c0_i32 = arith.constant 0 : i32
    %c0_i32_0 = arith.constant 0 : i32
    return %1, %c0_i32 : i32, i32
  }
  func.func @transform_1(%arg0: i32, %arg1: i32) -> (i32, i32) {
    %c1_i32 = arith.constant 1 : i32
    %0 = arith.muli %arg0, %c1_i32 : i32
    %1 = arith.addi %0, %arg1 : i32
    %c0_i32 = arith.constant 0 : i32
    %c0_i32_0 = arith.constant 0 : i32
    return %1, %c0_i32 : i32, i32
  }
  func.func @transform_2(%arg0: i32, %arg1: i32) -> (i32, i32) {
    %c0_i32 = arith.constant 0 : i32
    %c0_i32_0 = arith.constant 0 : i32
    return %arg0, %c0_i32 : i32, i32
  }
}

</mosaic_0001>

<llo_original>
// kernel: tpu_custom_call.1
$region0: #{tpu_custom_call.1}
  #allocation0 [shape = 'u32[]', space=smem, size = 0x4, offset = 0x4, fixed_abs, tag = 'smem constant byte address 0x4 - core index']
  #allocation1 [shape = 'u32[144,128]{1,0:T(1,128)}', space=vmem, size = 0x12000, scoped, tag = 'internal scratch']
  %s0 = inlined_call_operand.hbm [shape: f32[1,2048], index: 0, kind: input, shape index: {}]
  %s1 = inlined_call_operand.hbm [shape: f32[1,2048], index: 1, kind: input, shape index: {}]
  %s2 = inlined_call_operand.hbm [shape: f32[1,2048], index: 2, kind: output, shape index: {}]
  %s3 = sld [smem:[#allocation0]]
  $region30: #{tpu_custom_call.1} parent=0
    _
  %s5 = ssub.s32 1, %s3
  %s6 = scalar_select 0, %s5, %s3
  $region1: #{tpu_custom_call.1} parent=0
    #allocation2 [shape = 'u8[8192]{0}', space=vmem, size = 0x2000, scoped, tag = 'input window, operand 0, single buffered']
    #allocation3 [shape = 's32[1]{0}', space=sflag, size = 0x4, scoped, tag = 'scoped memory for tpu_custom_call.1']
    #allocation4 [shape = 's32[1]{0}', space=sflag, size = 0x4, scoped, tag = 'scoped memory for tpu_custom_call.1']
    #allocation5 [shape = 'u8[8192]{0}', space=vmem, size = 0x2000, scoped, tag = 'input window, operand 1, single buffered']
    #allocation6 [shape = 's32[1]{0}', space=sflag, size = 0x4, scoped, tag = 'scoped memory for tpu_custom_call.1']
    #allocation7 [shape = 'u8[8192]{0}', space=vmem, size = 0x2000, scoped, tag = 'output window, operand 0, single buffered']
    %7 = vsyncpa [#allocation3], 0
    %8 = vsyncpa [#allocation6], 0
    %9 = vsyncpa [#allocation4], 0
    // Predicated region
    $region2: #{tpu_custom_call.1} parent=1 // pred_check
      _
    $region3: #{tpu_custom_call.1} parent=1 // pred_check_branch
      %11 = sbr.rel (0) target = $region5
    $region4: #{tpu_custom_call.1} parent=1 // pred_region
      %s12 = sadd.s32 0, 0
      %s14 = ssub.s32 256, 256
      %15 = vsyncadd [#allocation3], %s14
      %s16 = smul.addr %s12, 16
      %s17 = smul.addr %s16, 16
      %s18 = scalar_lea.hbm %s0, %s17
      %s20 = sshll.u32 [#allocation2], 4
      %s21 = int_to_ptr.vmem [resolvable:$true] %s20
      %23 = dma.hbm_to_vmem [thread:$0]  %s18, 256, %s21, [#allocation3]
    $region5: #{tpu_custom_call.1} parent=1 // pred_fallthru
      _
    // Predicated region
    $region6: #{tpu_custom_call.1} parent=1 // pred_check
      _
    $region7: #{tpu_custom_call.1} parent=1 // pred_check_branch
      %25 = sbr.rel (0) target = $region9
    $region8: #{tpu_custom_call.1} parent=1 // pred_region
      %s26 = sadd.s32 0, 0
      %s28 = ssub.s32 256, 256
      %29 = vsyncadd [#allocation6], %s28
      %s30 = smul.addr %s26, 16
      %s31 = smul.addr %s30, 16
      %s32 = scalar_lea.hbm %s1, %s31
      %s34 = sshll.u32 [#allocation5], 4
      %s35 = int_to_ptr.vmem [resolvable:$true] %s34
      %37 = dma.hbm_to_vmem [thread:$0]  %s32, 256, %s35, [#allocation6]
    $region9: #{tpu_custom_call.1} parent=1 // pred_fallthru
      _
    // Predicated region
    $region10: #{tpu_custom_call.1} parent=1 // pred_check
      _
    $region11: #{tpu_custom_call.1} parent=1 // pred_check_branch
      %39 = sbr.rel (0) target = $region13
    $region12: #{tpu_custom_call.1} parent=1 // pred_region
      %40 = dma.done [#allocation3], 256
    $region13: #{tpu_custom_call.1} parent=1 // pred_fallthru
      _
    // Predicated region
    $region14: #{tpu_custom_call.1} parent=1 // pred_check
      _
    $region15: #{tpu_custom_call.1} parent=1 // pred_check_branch
      %42 = sbr.rel (0) target = $region17
    $region16: #{tpu_custom_call.1} parent=1 // pred_region
      %43 = dma.done [#allocation6], 256
    $region17: #{tpu_custom_call.1} parent=1 // pred_fallthru
      _
    %s44 = sadd.s32 0, 0
    %s45 = sadd.s32 0, 0
    %p46 = scmp.eq.s32.totalorder 0, 0
    // Predicated region
    $region18: #{tpu_custom_call.1} parent=1 // pred_check
      %p47 = pneg %p46
    $region19: #{tpu_custom_call.1} parent=1 // pred_check_branch
      %49 = sbr.rel (%p47) target = $region21
    $region20: #{tpu_custom_call.1} parent=1 // pred_region
      %50 = vst [vmem:[#allocation7] sm:$0xff] 0.0
      %51 = vst [vmem:[#allocation7 + $0x8] sm:$0xff] 0.0
    $region21: #{tpu_custom_call.1} parent=1 // pred_fallthru
      _
    %v52 = vld [vmem:[#allocation2] sm:$0xff]
    %v53 = vld [vmem:[#allocation2 + $0x8] sm:$0xff]
    %v54 = vld [vmem:[#allocation5] sm:$0xff]
    %v55 = vld [vmem:[#allocation5 + $0x8] sm:$0xff]
    %v56 = vsub.f32 %v52, %v54
    %v57 = vsub.f32 %v53, %v55
    %v58 = vand.u32 2147483647, %v56
    %v59 = vand.u32 2147483647, %v57
    %vm60 = vcmp.lt.f32.partialorder %v58, 1.0
    %vm61 = vcmp.lt.f32.partialorder %v59, 1.0
    %v62 = vmul.f32 %v58, %v58
    %v63 = vmul.f32 %v59, %v59
    %v64 = vmul.f32 %v62, 0.5
    %v65 = vmul.f32 %v63, 0.5
    %v66 = vsub.f32 %v58, 0.5
    %v67 = vsub.f32 %v59, 0.5
    %v68 = vsel %vm60, %v64, %v66
    %v69 = vsel %vm61, %v65, %v67
    %v70 = vld [vmem:[#allocation7] sm:$0xff]
    %v71 = vld [vmem:[#allocation7 + $0x8] sm:$0xff]
    %v72 = vadd.f32 %v70, %v68
    %v73 = vadd.f32 %v71, %v69
    %74 = vst [vmem:[#allocation7] sm:$0xff] %v72
    %75 = vst [vmem:[#allocation7 + $0x8] sm:$0xff] %v73
    // Predicated region
    $region22: #{tpu_custom_call.1} parent=1 // pred_check
      _
    $region23: #{tpu_custom_call.1} parent=1 // pred_check_branch
      %77 = sbr.rel (0) target = $region25
    $region24: #{tpu_custom_call.1} parent=1 // pred_region
      %s79 = ssub.s32 256, 256
      %80 = vsyncadd [#allocation4], %s79
      %s82 = sshll.u32 [#allocation7], 4
      %s83 = int_to_ptr.vmem [resolvable:$true] %s82
      %85 = dma.vmem_to_hbm [thread:$0]  %s83, 256, %s2, [#allocation4]
    $region25: #{tpu_custom_call.1} parent=1 // pred_fallthru
      _
    // Predicated region
    $region26: #{tpu_custom_call.1} parent=1 // pred_check
      _
    $region27: #{tpu_custom_call.1} parent=1 // pred_check_branch
      %87 = sbr.rel (0) target = $region29
    $region28: #{tpu_custom_call.1} parent=1 // pred_region
      %88 = dma.done [#allocation4], 256
    $region29: #{tpu_custom_call.1} parent=1 // pred_fallthru
      _
    %89 = vsyncpa [#allocation3], 1
    %90 = vsyncpa [#allocation6], 1
    %91 = vsyncpa [#allocation4], 1

</llo_original>
